<compile_context>
chip_gen: v5e
topology: v5e:2x2
jax: 0.10.0
libtpu: 0.0.40
codegen_flags: <defaults>
</compile_context>

<pallas_src>
from collections import namedtuple

import numpy as np
import jax
import jax.numpy as jnp
from jax import lax
from jax.experimental import pallas as pl
from jax.experimental.pallas import tpu as pltpu

UnpoolDescription = namedtuple(
    "UnpoolDescription", ["edge_index", "cluster", "batch", "new_edge_score"]
)

_LANE = 128
_VMEM_LIMIT = 48 * 1024 * 1024   # explicit scoped-VMEM budget (v5e default is only 16 MiB)


def _round_up(n, m):
    return ((n + m - 1) // m) * m


def _pick_tile(dim, prefs):
    # dim is always a multiple of 128, so one of these always divides it.
    for t in prefs:
        if dim % t == 0:
            return t
    return dim


# ----------------------------- Pallas kernels ------------------------------

def _graphconv_kernel(a_ref, hk_ref, hi_ref, w_ref, b_ref, wp_ref,
                      o_ref, p_ref, acc_ref):
    """One (row-block i, reduction-block k) step of:
         h_new = relu(normalize([A@H | H] @ [Wr; Wo] + b))
         proj  = h_new @ Wproj     (EdgePooling score projection, lane-dense)
    """
    cp = hk_ref.shape[1]
    k = pl.program_id(1)

    @pl.when(k == 0)
    def _init():
        acc_ref[:, :cp] = jnp.zeros((acc_ref.shape[0], cp), jnp.float32)
        acc_ref[:, cp:] = hi_ref[...]            # root features for lin_root

    # A tile lives in HBM as bf16 (halves DMA bytes); upcast so h stays exact f32.
    acc_ref[:, :cp] += jnp.dot(a_ref[...].astype(jnp.float32), hk_ref[...],
                               preferred_element_type=jnp.float32)

    @pl.when(k == pl.num_programs(1) - 1)
    def _finalize():
        # Single fused matmul: K = 2*C ([agg | root] against stacked [Wr; Wo]).
        lin = jnp.dot(acc_ref[...], w_ref[...],
                      preferred_element_type=jnp.float32) + b_ref[...]
        # F.normalize(p=2, dim=1): x / max(||x||, 1e-12) == x * rsqrt(max(||x||^2, 1e-24))
        inv = lax.rsqrt(jnp.maximum(
            jnp.sum(lin * lin, axis=-1, keepdims=True), 1e-24))
        h_new = jnp.maximum(lin * inv, 0.0)      # relu
        o_ref[...] = h_new
        p_ref[...] = jnp.dot(h_new, wp_ref[...],
                             preferred_element_type=jnp.float32)


def graphconv(A_bf16, h_pad, w_fused, bias_pad, wproj_pad):
    NP = A_bf16.shape[0]
    CP = h_pad.shape[1]
    tm = _pick_tile(NP, (256, 128))
    tk = _pick_tile(NP, (512, 256, 128))
    grid = (NP // tm, NP // tk)
    return pl.pallas_call(
        _graphconv_kernel,
        out_shape=(jax.ShapeDtypeStruct((NP, CP), jnp.float32),
                   jax.ShapeDtypeStruct((NP, _LANE), jnp.float32)),
        grid_spec=pltpu.PrefetchScalarGridSpec(
            num_scalar_prefetch=0, grid=grid,
            in_specs=[
                pl.BlockSpec((tm, tk), lambda i, k: (i, k)),        # A (bf16)
                pl.BlockSpec((tk, CP), lambda i, k: (k, 0)),        # H neighbor rows
                pl.BlockSpec((tm, CP), lambda i, k: (i, 0)),        # H root rows
                pl.BlockSpec((2 * CP, CP), lambda i, k: (0, 0)),    # [Wr; Wo] fused
                pl.BlockSpec((1, CP), lambda i, k: (0, 0)),         # bias
                pl.BlockSpec((CP, _LANE), lambda i, k: (0, 0)),     # edge-score proj W
            ],
            out_specs=(pl.BlockSpec((tm, CP), lambda i, k: (i, 0)),
                       pl.BlockSpec((tm, _LANE), lambda i, k: (i, 0))),
            scratch_shapes=[pltpu.VMEM((tm, 2 * CP), jnp.float32)]),
        compiler_params=pltpu.CompilerParams(
            dimension_semantics=("parallel", "arbitrary"),
            vmem_limit_bytes=_VMEM_LIMIT),
    )(A_bf16, h_pad, h_pad, w_fused, bias_pad, wproj_pad)


def _pool_kernel(m_ref, x_ref, s_ref, o_ref, acc_ref):
    # scatter_add(x, cluster) as a tiled one-hot matmul, then scale by edge score.
    k = pl.program_id(1)

    @pl.when(k == 0)
    def _init():
        acc_ref[...] = jnp.zeros_like(acc_ref)

    acc_ref[...] += jnp.dot(m_ref[...].astype(jnp.float32), x_ref[...],
                            preferred_element_type=jnp.float32)

    @pl.when(k == pl.num_programs(1) - 1)
    def _finalize():
        o_ref[...] = acc_ref[...] * s_ref[...]


def pool_scatter(M_bf16, x_pad, score_pad):
    KP, NP = M_bf16.shape
    CP = x_pad.shape[1]
    tkm = _pick_tile(KP, (256, 128))
    tkn = _pick_tile(NP, (512, 256, 128))
    grid = (KP // tkm, NP // tkn)
    return pl.pallas_call(
        _pool_kernel,
        out_shape=jax.ShapeDtypeStruct((KP, CP), jnp.float32),
        grid_spec=pltpu.PrefetchScalarGridSpec(
            num_scalar_prefetch=0, grid=grid,
            in_specs=[
                pl.BlockSpec((tkm, tkn), lambda i, k: (i, k)),   # one-hot M (bf16)
                pl.BlockSpec((tkn, CP), lambda i, k: (k, 0)),    # node features
                pl.BlockSpec((tkm, 1), lambda i, k: (i, 0)),     # new edge scores
            ],
            out_specs=pl.BlockSpec((tkm, CP), lambda i, k: (i, 0)),
            scratch_shapes=[pltpu.VMEM((tkm, CP), jnp.float32)]),
        compiler_params=pltpu.CompilerParams(
            dimension_semantics=("parallel", "arbitrary"),
            vmem_limit_bytes=_VMEM_LIMIT),
    )(M_bf16, x_pad, score_pad)


def _heads_kernel(h_ref, w_ref, b_ref, o_ref):
    # mu and log_var fused into one matmul with [Wmu | Wlv]; split outside.
    o_ref[...] = jnp.dot(h_ref[...], w_ref[...],
                         preferred_element_type=jnp.float32) + b_ref[...]


def heads_fused(h, w_cat, b_cat, hidden):
    N, CP = h.shape
    NP = _round_up(N, _LANE)
    HP2 = w_cat.shape[1]
    h_pad = jnp.pad(h, ((0, NP - N), (0, 0)))
    tm = _pick_tile(NP, (256, 128))
    out = pl.pallas_call(
        _heads_kernel,
        out_shape=jax.ShapeDtypeStruct((NP, HP2), jnp.float32),
        grid_spec=pltpu.PrefetchScalarGridSpec(
            num_scalar_prefetch=0, grid=(NP // tm,),
            in_specs=[
                pl.BlockSpec((tm, CP), lambda i: (i, 0)),
                pl.BlockSpec((CP, HP2), lambda i: (0, 0)),
                pl.BlockSpec((1, HP2), lambda i: (0, 0)),
            ],
            out_specs=pl.BlockSpec((tm, HP2), lambda i: (i, 0))),
        compiler_params=pltpu.CompilerParams(
            dimension_semantics=("parallel",),
            vmem_limit_bytes=_VMEM_LIMIT),
    )(h_pad, w_cat, b_cat)
    HP = HP2 // 2
    return out[:N, :hidden], out[:N, HP:HP + hidden]


# ------------------------------- glue (device) ------------------------------

def build_adj(src, dst, NP):
    # A[i, j] = #edges (j -> i); GraphConv(aggr='add') aggregates into dst.
    # Built on device; small integer counts are exact in bf16.
    a = jnp.zeros((NP, NP), jnp.float32).at[dst, src].add(1.0)
    return a.astype(jnp.bfloat16)


def segment_softmax(raw, index, num_nodes):
    # PyG softmax over incoming edges of each target node (device-side).
    m = jax.ops.segment_max(raw, index, num_segments=num_nodes)
    ex = jnp.exp(raw - m[index])
    s = jax.ops.segment_sum(ex, index, num_segments=num_nodes)
    return ex / (s[index] + 1e-16)


# ------------------------------- glue (host) --------------------------------

def merge_edges_greedy(edge_index, edge_score, N):
    # TODO(synk): the greedy edge contraction is sequential and data-dependent;
    # it has no clean Pallas equivalent and stays on the host (only E scores synced).
    nodes_remaining = set(range(N))
    cluster = np.empty(N, dtype=np.int64)
    order = edge_score.argsort(kind="stable")[::-1]
    i = 0
    new_edge_indices = []
    for edge_idx in order.tolist():
        source = int(edge_index[0, edge_idx])
        if source not in nodes_remaining:
            continue
        target = int(edge_index[1, edge_idx])
        if target not in nodes_remaining:
            continue
        new_edge_indices.append(edge_idx)
        cluster[source] = i
        nodes_remaining.remove(source)
        if source != target:
            cluster[target] = i
            nodes_remaining.remove(target)
        i += 1
    for node_idx in sorted(nodes_remaining):
        cluster[node_idx] = i
        i += 1
    return cluster, np.asarray(new_edge_indices, dtype=np.int64), i, len(nodes_remaining)


def edge_pooling(h_out_pad, proj, edge_index, batch_np, lin_bias, N):
    src = jnp.asarray(edge_index[0], jnp.int32)
    dst = jnp.asarray(edge_index[1], jnp.int32)
    raw = proj[src, 0] + proj[dst, 1] + lin_bias
    # TODO(synk): F.dropout on edge scores skipped (eval mode / dropout == 0).
    e = segment_softmax(raw, dst, N) + 0.5
    e_np = np.asarray(e)                              # D2H sync of only E floats

    cluster, new_edge_indices, K, n_remaining = merge_edges_greedy(
        edge_index, e_np, N)
    new_edge_score = e_np[new_edge_indices]
    if n_remaining > 0:
        new_edge_score = np.concatenate(
            [new_edge_score, np.ones(K - len(new_edge_indices), np.float32)])

    NP = h_out_pad.shape[0]
    KP = _round_up(K, _LANE)
    # One-hot scatter matrix built on device in bf16 (exact {0,1}).
    M = (jnp.zeros((KP, NP), jnp.float32)
         .at[jnp.asarray(cluster, jnp.int32), jnp.arange(N)].set(1.0)
         .astype(jnp.bfloat16))
    score = (jnp.zeros((KP, 1), jnp.float32)
             .at[:K, 0].set(jnp.asarray(new_edge_score, jnp.float32)))
    new_x = pool_scatter(M, h_out_pad, score)[:K]

    # coalesce(cluster[edge_index]): sort + dedup (tiny host int work)
    ci = cluster[edge_index]
    keys = np.unique(ci[0] * K + ci[1])
    new_edge_index = np.stack([keys // K, keys % K]).astype(np.int64)
    new_batch = np.zeros(K, np.int64)
    new_batch[cluster] = batch_np

    info = UnpoolDescription(edge_index=edge_index, cluster=cluster,
                             batch=batch_np, new_edge_score=new_edge_score)
    return new_x, new_edge_index, new_batch, info


def hg_encoder_forward(dev_params, x, edge_index, batch, in_channels, hidden):
    # nn.Dropout layers are identity (eval mode / dropout_ratio == 0).
    CP = dev_params["cp"]
    h = jnp.pad(jnp.asarray(x, jnp.float32), ((0, 0), (0, CP - in_channels)))
    ei = np.asarray(edge_index)
    b_np = np.asarray(batch)
    unpool_infos = []
    n_layers = len(dev_params["gcn"])
    for i, (w_fused, bias_pad) in enumerate(dev_params["gcn"]):
        N = h.shape[0]
        NP = _round_up(N, _LANE)
        h_pad = jnp.pad(h, ((0, NP - N), (0, 0)))
        src = jnp.asarray(ei[0], jnp.int32)
        dst = jnp.asarray(ei[1], jnp.int32)
        A = build_adj(src, dst, NP)                       # device, bf16
        h_out_pad, proj_pad = graphconv(A, h_pad, w_fused, bias_pad,
                                        dev_params["proj"][i])
        if i != n_layers - 1:
            proj = proj_pad[:N, :2]
            h, ei, b_np, info = edge_pooling(
                h_out_pad, proj, ei, b_np, dev_params["pool_bias"][i], N)
            unpool_infos.append(info)
        else:
            h = h_out_pad[:N]
    mu, log_var = heads_fused(h, dev_params["head_w"], dev_params["head_b"], hidden)
    return h[:, :hidden], mu, log_var, unpool_infos


# ------------------------------- parameters ---------------------------------

def init_params(key, in_channels, hidden, depth):
    # Logical parameters, matching the PyTorch module layout (weights pre-transposed).
    params = {"gcn": [], "pool": []}
    dims = [(in_channels, hidden)] + [(hidden, hidden)] * depth
    for cin, cout in dims:
        key, k1, k2, k3 = jax.random.split(key, 4)
        bound = 1.0 / np.sqrt(cin)
        params["gcn"].append((
            jax.random.uniform(k1, (cin, cout), jnp.float32, -bound, bound),  # lin_rel W^T
            jax.random.uniform(k2, (cin, cout), jnp.float32, -bound, bound),  # lin_root W^T
            jax.random.uniform(k3, (1, cout), jnp.float32, -bound, bound),    # lin_rel bias
        ))
    for _ in range(depth):
        key, k1, k2 = jax.random.split(key, 3)
        bound = 1.0 / np.sqrt(2 * hidden)
        params["pool"].append((
            jax.random.uniform(k1, (1, 2 * hidden), jnp.float32, -bound, bound),
            jax.random.uniform(k2, (1,), jnp.float32, -bound, bound),
        ))
    gain = np.sqrt(2.0)                       # xavier_uniform with relu gain
    xb = gain * np.sqrt(6.0 / (hidden + hidden))
    lb = 1.0 / np.sqrt(hidden)
    key, k1, k2, k3, k4 = jax.random.split(key, 5)
    params["mu_w_t"] = jax.random.uniform(k1, (hidden, hidden), jnp.float32, -xb, xb)
    params["mu_b"] = jax.random.uniform(k2, (1, hidden), jnp.float32, -lb, lb)
    params["lv_w_t"] = jax.random.uniform(k3, (hidden, hidden), jnp.float32, -xb, xb)
    params["lv_b"] = jax.random.uniform(k4, (1, hidden), jnp.float32, -lb, lb)
    return params


def prepare_device_params(params, in_channels, hidden):
    # Pad / fuse once: channels to lane-dense 128 multiples, lin_rel+lin_root
    # stacked into one (2*CP, CP) weight, mu/log_var heads concatenated.
    CP = _round_up(max(in_channels, hidden), _LANE)
    HP = _round_up(hidden, _LANE)
    dev = {"cp": CP, "gcn": [], "proj": [], "pool_bias": []}
    for (wr, wo, b) in params["gcn"]:
        cin, cout = wr.shape
        w = jnp.zeros((2 * CP, CP), jnp.float32)
        w = w.at[:cin, :cout].set(wr)               # rows [0, CP)   <- aggregated feats
        w = w.at[CP:CP + cin, :cout].set(wo)        # rows [CP, 2CP) <- root feats
        bp = jnp.zeros((1, CP), jnp.float32).at[:, :cout].set(b)
        dev["gcn"].append((w, bp))
    for (lin_w, lin_b) in params["pool"]:
        wp = jnp.zeros((CP, _LANE), jnp.float32)
        wp = wp.at[:hidden, 0].set(lin_w[0, :hidden])    # source half of EdgePooling.lin
        wp = wp.at[:hidden, 1].set(lin_w[0, hidden:])    # target half
        dev["proj"].append(wp)
        dev["pool_bias"].append(lin_b[0])
    dev["proj"].append(jnp.zeros((CP, _LANE), jnp.float32))   # last layer: unused
    w_cat = jnp.zeros((CP, 2 * HP), jnp.float32)
    w_cat = w_cat.at[:hidden, :hidden].set(params["mu_w_t"])
    w_cat = w_cat.at[:hidden, HP:HP + hidden].set(params["lv_w_t"])
    b_cat = jnp.zeros((1, 2 * HP), jnp.float32)
    b_cat = b_cat.at[:, :hidden].set(params["mu_b"])
    b_cat = b_cat.at[:, HP:HP + hidden].set(params["lv_b"])
    dev["head_w"] = w_cat
    dev["head_b"] = b_cat
    return dev


if __name__ == "__main__":
    key = jax.random.PRNGKey(0)
    in_channels, hidden, depth = 8, 32, 2
    N, E = 16, 40

    key, kx, ks, kd, kp = jax.random.split(key, 5)
    x = jax.random.normal(kx, (N, in_channels), jnp.float32)
    src = np.asarray(jax.random.randint(ks, (E,), 0, N))
    dst = np.asarray(jax.random.randint(kd, (E,), 0, N))
    edge_index = np.stack([src, dst]).astype(np.int64)
    batch = np.zeros(N, np.int64)

    params = init_params(kp, in_channels, hidden, depth)
    dev_params = prepare_device_params(params, in_channels, hidden)

    h, mu, log_var, unpool_infos = hg_encoder_forward(
        dev_params, x, edge_index, batch, in_channels, hidden)
    jax.block_until_ready((h, mu, log_var))

    assert h.shape[1] == hidden
    assert mu.shape == h.shape and log_var.shape == h.shape
    assert len(unpool_infos) == depth
    assert bool(jnp.all(jnp.isfinite(h))) and bool(jnp.all(jnp.isfinite(mu)))
    print("KERNEL_OK")
</pallas_src>

<mosaic_0001>
module attributes {stable_mosaic.version = 11 : i64} {
  func.func @_graphconv_kernel(%arg0: i32, %arg1: i32, %arg2: memref<128x128xbf16, #tpu.memory_space<vmem>>, %arg3: memref<128x128xf32, #tpu.memory_space<vmem>>, %arg4: memref<128x128xf32, #tpu.memory_space<vmem>>, %arg5: memref<256x128xf32, #tpu.memory_space<vmem>>, %arg6: memref<1x128xf32, #tpu.memory_space<vmem>>, %arg7: memref<128x128xf32, #tpu.memory_space<vmem>>, %arg8: memref<128x128xf32, #tpu.memory_space<vmem>>, %arg9: memref<128x128xf32, #tpu.memory_space<vmem>>, %arg10: memref<128x256xf32, #tpu.memory_space<vmem>>) attributes {dimension_semantics = [#tpu.dimension_semantics<parallel>, #tpu.dimension_semantics<arbitrary>], iteration_bounds = array<i64: 1, 1>, scalar_prefetch = 0 : i64, scratch_operands = 1 : i64, tpu.core_type = #tpu.core_type<tc>, window_params = [{transform_indices = @transform_0, window_bounds = array<i64: 128, 128>}, {transform_indices = @transform_1, window_bounds = array<i64: 128, 128>}, {transform_indices = @transform_2, window_bounds = array<i64: 128, 128>}, {pipeline_mode = #tpu.pipeline_mode<synchronous>, transform_indices = @transform_3, window_bounds = array<i64: 256, 128>}, {pipeline_mode = #tpu.pipeline_mode<synchronous>, transform_indices = @transform_4, window_bounds = array<i64: 1, 128>}, {pipeline_mode = #tpu.pipeline_mode<synchronous>, transform_indices = @transform_5, window_bounds = array<i64: 128, 128>}, {transform_indices = @transform_6, window_bounds = array<i64: 128, 128>}, {transform_indices = @transform_7, window_bounds = array<i64: 128, 128>}]} {
    %c0_i32 = arith.constant 0 : i32
    %0 = arith.cmpi eq, %arg1, %c0_i32 : i32
    %1 = arith.extui %0 : i1 to i32
    %c0_i32_0 = arith.constant 0 : i32
    %2 = arith.cmpi ne, %1, %c0_i32_0 : i32
    scf.if %2 {
      %cst_10 = arith.constant 0.000000e+00 : f32
      %13 = vector.broadcast %cst_10 : f32 to vector<128x128xf32>
      %c0_11 = arith.constant 0 : index
      %c0_12 = arith.constant 0 : index
      %14 = vector.load %arg10[%c0_11, %c0_12] : memref<128x256xf32, #tpu.memory_space<vmem>>, vector<128x128xf32>
      tpu.vector_store %arg10[%c0_11, %c0_12], %13 {strides = array<i32>} : memref<128x256xf32, #tpu.memory_space<vmem>>, vector<128x128xf32>,
      %c0_13 = arith.constant 0 : index
      %c0_14 = arith.constant 0 : index
      %15 = vector.load %arg4[%c0_13, %c0_14] : memref<128x128xf32, #tpu.memory_space<vmem>>, vector<128x128xf32>
      %c0_15 = arith.constant 0 : index
      %c128 = arith.constant 128 : index
      %16 = vector.load %arg10[%c0_15, %c128] : memref<128x256xf32, #tpu.memory_space<vmem>>, vector<128x128xf32>
      tpu.vector_store %arg10[%c0_15, %c128], %15 {strides = array<i32>} : memref<128x256xf32, #tpu.memory_space<vmem>>, vector<128x128xf32>,
    } else {
    }
    %c0 = arith.constant 0 : index
    %c0_1 = arith.constant 0 : index
    %3 = vector.load %arg10[%c0, %c0_1] : memref<128x256xf32, #tpu.memory_space<vmem>>, vector<128x128xf32>
    %c0_2 = arith.constant 0 : index
    %c0_3 = arith.constant 0 : index
    %4 = vector.load %arg2[%c0_2, %c0_3] : memref<128x128xbf16, #tpu.memory_space<vmem>>, vector<128x128xbf16>
    %5 = arith.extf %4 : vector<128x128xbf16> to vector<128x128xf32>
    %c0_4 = arith.constant 0 : index
    %c0_5 = arith.constant 0 : index
    %6 = vector.load %arg3[%c0_4, %c0_5] : memref<128x128xf32, #tpu.memory_space<vmem>>, vector<128x128xf32>
    %cst = arith.constant dense<0.000000e+00> : vector<128x128xf32>
    %7 = tpu.matmul %5, %6, %cst {dimension_numbers = #tpu.dot_dimension_numbers<[1], [0], [0], [1], [0, 0, 1, 1], [], []>} : vector<128x128xf32>, vector<128x128xf32>, vector<128x128xf32> -> vector<128x128xf32>
    %8 = arith.addf %3, %7 : vector<128x128xf32>
    %c0_6 = arith.constant 0 : index
    %c0_7 = arith.constant 0 : index
    %9 = vector.load %arg10[%c0_6, %c0_7] : memref<128x256xf32, #tpu.memory_space<vmem>>, vector<128x128xf32>
    tpu.vector_store %arg10[%c0_6, %c0_7], %8 {strides = array<i32>} : memref<128x256xf32, #tpu.memory_space<vmem>>, vector<128x128xf32>,
    %c0_i32_8 = arith.constant 0 : i32
    %10 = arith.cmpi eq, %arg1, %c0_i32_8 : i32
    %11 = arith.extui %10 : i1 to i32
    %c0_i32_9 = arith.constant 0 : i32
    %12 = arith.cmpi ne, %11, %c0_i32_9 : i32
    scf.if %12 {
      %c0_10 = arith.constant 0 : index
      %c0_11 = arith.constant 0 : index
      %13 = vector.load %arg10[%c0_10, %c0_11] : memref<128x256xf32, #tpu.memory_space<vmem>>, vector<128x256xf32>
      %c0_12 = arith.constant 0 : index
      %c0_13 = arith.constant 0 : index
      %14 = vector.load %arg5[%c0_12, %c0_13] : memref<256x128xf32, #tpu.memory_space<vmem>>, vector<256x128xf32>
      %cst_14 = arith.constant dense<0.000000e+00> : vector<128x128xf32>
      %15 = tpu.matmul %13, %14, %cst_14 {dimension_numbers = #tpu.dot_dimension_numbers<[1], [0], [0], [1], [0, 0, 1, 1], [], []>} : vector<128x256xf32>, vector<256x128xf32>, vector<128x128xf32> -> vector<128x128xf32>
      %c0_15 = arith.constant 0 : index
      %c0_16 = arith.constant 0 : index
      %16 = vector.load %arg6[%c0_15, %c0_16] : memref<1x128xf32, #tpu.memory_space<vmem>>, vector<1x128xf32>
      %17 = vector.broadcast %16 : vector<1x128xf32> to vector<128x128xf32>
      %18 = arith.addf %15, %17 : vector<128x128xf32>
      %19 = arith.mulf %18, %18 : vector<128x128xf32>
      %cst_17 = arith.constant dense<0.000000e+00> : vector<128xf32>
      %20 = vector.multi_reduction <add>, %19, %cst_17 [1] : vector<128x128xf32> to vector<128xf32>
      %21 = vector.shape_cast %20 : vector<128xf32> to vector<128x1xf32>
      %cst_18 = arith.constant 1.000000e-24 : f32
      %22 = vector.broadcast %cst_18 : f32 to vector<128x1xf32>
      %23 = arith.maximumf %21, %22 : vector<128x1xf32>
      %24 = math.rsqrt %23 : vector<128x1xf32>
      %25 = vector.broadcast %24 : vector<128x1xf32> to vector<128x128xf32>
      %26 = arith.mulf %18, %25 : vector<128x128xf32>
      %cst_19 = arith.constant 0.000000e+00 : f32
      %27 = vector.broadcast %cst_19 : f32 to vector<128x128xf32>
      %28 = arith.maximumf %26, %27 : vector<128x128xf32>
      %c0_20 = arith.constant 0 : index
      %c0_21 = arith.constant 0 : index
      %29 = vector.load %arg8[%c0_20, %c0_21] : memref<128x128xf32, #tpu.memory_space<vmem>>, vector<128x128xf32>
      tpu.vector_store %arg8[%c0_20, %c0_21], %28 {strides = array<i32>} : memref<128x128xf32, #tpu.memory_space<vmem>>, vector<128x128xf32>,
      %c0_22 = arith.constant 0 : index
      %c0_23 = arith.constant 0 : index
      %30 = vector.load %arg7[%c0_22, %c0_23] : memref<128x128xf32, #tpu.memory_space<vmem>>, vector<128x128xf32>
      %cst_24 = arith.constant dense<0.000000e+00> : vector<128x128xf32>
      %31 = tpu.matmul %28, %30, %cst_24 {dimension_numbers = #tpu.dot_dimension_numbers<[1], [0], [0], [1], [0, 0, 1, 1], [], []>} : vector<128x128xf32>, vector<128x128xf32>, vector<128x128xf32> -> vector<128x128xf32>
      %c0_25 = arith.constant 0 : index
      %c0_26 = arith.constant 0 : index
      %32 = vector.load %arg9[%c0_25, %c0_26] : memref<128x128xf32, #tpu.memory_space<vmem>>, vector<128x128xf32>
      tpu.vector_store %arg9[%c0_25, %c0_26], %31 {strides = array<i32>} : memref<128x128xf32, #tpu.memory_space<vmem>>, vector<128x128xf32>,
    } else {
    }
    return
  }
  func.func @transform_0(%arg0: i32, %arg1: i32) -> (i32, i32) {
    %c0_i32 = arith.constant 0 : i32
    return %arg0, %arg1 : i32, i32
  }
  func.func @transform_1(%arg0: i32, %arg1: i32) -> (i32, i32) {
    %c0_i32 = arith.constant 0 : i32
    %c0_i32_0 = arith.constant 0 : i32
    return %arg1, %c0_i32 : i32, i32
  }
  func.func @transform_2(%arg0: i32, %arg1: i32) -> (i32, i32) {
    %c0_i32 = arith.constant 0 : i32
    %c0_i32_0 = arith.constant 0 : i32
    return %arg0, %c0_i32 : i32, i32
  }
  func.func @transform_3(%arg0: i32, %arg1: i32) -> (i32, i32) {
    %c0_i32 = arith.constant 0 : i32
    %c0_i32_0 = arith.constant 0 : i32
    %c0_i32_1 = arith.constant 0 : i32
    return %c0_i32, %c0_i32_0 : i32, i32
  }
  func.func @transform_4(%arg0: i32, %arg1: i32) -> (i32, i32) {
    %c0_i32 = arith.constant 0 : i32
    %c0_i32_0 = arith.constant 0 : i32
    %c0_i32_1 = arith.constant 0 : i32
    return %c0_i32, %c0_i32_0 : i32, i32
  }
  func.func @transform_5(%arg0: i32, %arg1: i32) -> (i32, i32) {
    %c0_i32 = arith.constant 0 : i32
    %c0_i32_0 = arith.constant 0 : i32
    %c0_i32_1 = arith.constant 0 : i32
    return %c0_i32, %c0_i32_0 : i32, i32
  }
  func.func @transform_6(%arg0: i32, %arg1: i32) -> (i32, i32) {
    %c0_i32 = arith.constant 0 : i32
    %c0_i32_0 = arith.constant 0 : i32
    return %arg0, %c0_i32 : i32, i32
  }
  func.func @transform_7(%arg0: i32, %arg1: i32) -> (i32, i32) {
    %c0_i32 = arith.constant 0 : i32
    %c0_i32_0 = arith.constant 0 : i32
    return %arg0, %c0_i32 : i32, i32
  }
}

</mosaic_0001>

<llo_original>
// kernel: tpu_custom_call.1
$region0: #{tpu_custom_call.1}
  #allocation0 [shape = 'u32[]', space=smem, size = 0x4, offset = 0x4, fixed_abs, tag = 'smem constant byte address 0x4 - core index']
  #allocation1 [shape = 'u32[72,128]{1,0:T(1,128)}', space=vmem, size = 0x9000, scoped, tag = 'internal scratch']
  #allocation2 [shape = 'f32[128,256]{1,0:T(8,128)}', space=vmem, size = 0x20000, scoped, tag = 'scratch operand']
  %s0 = inlined_call_operand.hbm [shape: bf16[128,128], index: 0, kind: input, shape index: {}]
  %s1 = inlined_call_operand.hbm [shape: f32[128,128], index: 1, kind: input, shape index: {}]
  %s2 = inlined_call_operand.hbm [shape: f32[128,128], index: 2, kind: input, shape index: {}]
  %s3 = inlined_call_operand.hbm [shape: f32[256,128], index: 3, kind: input, shape index: {}]
  %s4 = inlined_call_operand.vmem [shape: f32[1,128], index: 4, kind: input, shape index: {}]
  %s5 = inlined_call_operand.hbm [shape: f32[128,128], index: 5, kind: input, shape index: {}]
  %s6 = inlined_call_operand.hbm [shape: f32[128,128], index: 6, kind: output, shape index: {0}]
  %s7 = inlined_call_operand.hbm [shape: f32[128,128], index: 7, kind: output, shape index: {1}]
  %8 = xla_tuple %s6, %s7
  %s9 = sld [smem:[#allocation0]]
  $region70: #{tpu_custom_call.1} parent=0
    _
  %s11 = ssub.s32 1, %s9
  %s12 = scalar_select 0, %s11, %s9
  $region1: #{tpu_custom_call.1} parent=0
    #allocation3 [shape = 'u8[32768]{0}', space=vmem, size = 0x8000, scoped, tag = 'input window, operand 0, single buffered']
    #allocation4 [shape = 's32[1]{0}', space=sflag, size = 0x4, scoped, tag = 'scoped memory for tpu_custom_call.1']
    #allocation5 [shape = 's32[1]{0}', space=sflag, size = 0x4, scoped, tag = 'scoped memory for tpu_custom_call.1']
    #allocation6 [shape = 'u8[65536]{0}', space=vmem, size = 0x10000, scoped, tag = 'input window, operand 1, single buffered']
    #allocation7 [shape = 's32[1]{0}', space=sflag, size = 0x4, scoped, tag = 'scoped memory for tpu_custom_call.1']
    #allocation8 [shape = 'u8[65536]{0}', space=vmem, size = 0x10000, scoped, tag = 'input window, operand 2, single buffered']
    #allocation9 [shape = 'u8[131072]{0}', space=vmem, size = 0x20000, scoped, tag = 'input window, operand 3, single buffered']
    #allocation10 [shape = 's32[1]{0}', space=sflag, size = 0x4, scoped, tag = 'scoped memory for tpu_custom_call.1']
    #allocation11 [shape = 'u8[65536]{0}', space=vmem, size = 0x10000, scoped, tag = 'input window, operand 5, single buffered']
    #allocation12 [shape = 'u8[65536]{0}', space=vmem, size = 0x10000, scoped, tag = 'output window, operand 0, single buffered']
    #allocation13 [shape = 'u8[65536]{0}', space=vmem, size = 0x10000, scoped, tag = 'output window, operand 1, single buffered']
    #allocation14 [shape = 's32[1]{0}', space=sflag, size = 0x4, scoped, tag = 'scoped memory for tpu_custom_call.1']
    %13 = vsyncpa [#allocation4], 0
    %14 = vsyncpa [#allocation7], 0
    %15 = vsyncpa [#allocation10], 0
    %16 = vsyncpa [#allocation5], 0
    %17 = vsyncpa [#allocation14], 0
    // Predicated region
    $region2: #{tpu_custom_call.1} parent=1 // pred_check
      _
    $region3: #{tpu_custom_call.1} parent=1 // pred_check_branch
      %19 = sbr.rel (0) target = $region5
    $region4: #{tpu_custom_call.1} parent=1 // pred_region
      %21 = vsyncadd [#allocation4], 0
      %s22 = sshll.u32 %s0, 4
      %s23 = int_to_ptr.hbm [resolvable:$true] %s22
      %s24 = sshll.u32 [#allocation3], 4
      %s25 = int_to_ptr.vmem [resolvable:$true] %s24
      %30 = dma.hbm_to_vmem [thread:$0]  %s23, 1024, %s25, [#allocation4], 64, 64, 4
    $region5: #{tpu_custom_call.1} parent=1 // pred_fallthru
      _
    // Predicated region
    $region6: #{tpu_custom_call.1} parent=1 // pred_check
      _
    $region7: #{tpu_custom_call.1} parent=1 // pred_check_branch
      %32 = sbr.rel (0) target = $region9
    $region8: #{tpu_custom_call.1} parent=1 // pred_region
      %34 = vsyncadd [#allocation7], 0
      %s35 = sshll.u32 %s1, 4
      %s36 = int_to_ptr.hbm [resolvable:$true] %s35
      %s37 = sshll.u32 [#allocation6], 4
      %s38 = int_to_ptr.vmem [resolvable:$true] %s37
      %43 = dma.hbm_to_vmem [thread:$0]  %s36, 2048, %s38, [#allocation7], 128, 128, 8
    $region9: #{tpu_custom_call.1} parent=1 // pred_fallthru
      _
    // Predicated region
    $region10: #{tpu_custom_call.1} parent=1 // pred_check
      _
    $region11: #{tpu_custom_call.1} parent=1 // pred_check_branch
      %45 = sbr.rel (0) target = $region13
    $region12: #{tpu_custom_call.1} parent=1 // pred_region
      %47 = vsyncadd [#allocation7], 0
      %s48 = sshll.u32 %s2, 4
      %s49 = int_to_ptr.hbm [resolvable:$true] %s48
      %s50 = sshll.u32 [#allocation8], 4
      %s51 = int_to_ptr.vmem [resolvable:$true] %s50
      %56 = dma.hbm_to_vmem [thread:$0]  %s49, 2048, %s51, [#allocation7], 128, 128, 8
    $region13: #{tpu_custom_call.1} parent=1 // pred_fallthru
      _
    // Predicated region
    $region14: #{tpu_custom_call.1} parent=1 // pred_check
      _
    $region15: #{tpu_custom_call.1} parent=1 // pred_check_branch
      %58 = sbr.rel (0) target = $region17
    $region16: #{tpu_custom_call.1} parent=1 // pred_region
      %60 = vsyncadd [#allocation10], 0
      %s61 = sshll.u32 %s3, 4
      %s62 = int_to_ptr.hbm [resolvable:$true] %s61
      %s63 = sshll.u32 [#allocation9], 4
      %s64 = int_to_ptr.vmem [resolvable:$true] %s63
      %69 = dma.hbm_to_vmem [thread:$0]  %s62, 4096, %s64, [#allocation10], 128, 128, 8
    $region17: #{tpu_custom_call.1} parent=1 // pred_fallthru
      _
    // Predicated region
    $region18: #{tpu_custom_call.1} parent=1 // pred_check
      _
    $region19: #{tpu_custom_call.1} parent=1 // pred_check_branch
      %71 = sbr.rel (0) target = $region21
    $region20: #{tpu_custom_call.1} parent=1 // pred_region
      _
    $region21: #{tpu_custom_call.1} parent=1 // pred_fallthru
      _
    // Predicated region
    $region22: #{tpu_custom_call.1} parent=1 // pred_check
      _
    $region23: #{tpu_custom_call.1} parent=1 // pred_check_branch
      %73 = sbr.rel (0) target = $region25
    $region24: #{tpu_custom_call.1} parent=1 // pred_region
      %75 = vsyncadd [#allocation10], 0
      %s76 = sshll.u32 %s5, 4
      %s77 = int_to_ptr.hbm [resolvable:$true] %s76
      %s78 = sshll.u32 [#allocation11], 4
      %s79 = int_to_ptr.vmem [resolvable:$true] %s78
      %84 = dma.hbm_to_vmem [thread:$0]  %s77, 2048, %s79, [#allocation10], 128, 128, 8
    $region25: #{tpu_custom_call.1} parent=1 // pred_fallthru
      _
    // Predicated region
    $region26: #{tpu_custom_call.1} parent=1 // pred_check
      _
    $region27: #{tpu_custom_call.1} parent=1 // pred_check_branch
      %86 = sbr.rel (0) target = $region29
    $region28: #{tpu_custom_call.1} parent=1 // pred_region
      %88 = dma.done [#allocation4], 1024
    $region29: #{tpu_custom_call.1} parent=1 // pred_fallthru
      _
    // Predicated region
    $region30: #{tpu_custom_call.1} parent=1 // pred_check
      _
    $region31: #{tpu_custom_call.1} parent=1 // pred_check_branch
      %90 = sbr.rel (0) target = $region33
    $region32: #{tpu_custom_call.1} parent=1 // pred_region
      %92 = dma.done [#allocation7], 2048
    $region33: #{tpu_custom_call.1} parent=1 // pred_fallthru
      _
    // Predicated region
    $region34: #{tpu_custom_call.1} parent=1 // pred_check
      _
    $region35: #{tpu_custom_call.1} parent=1 // pred_check_branch
      %94 = sbr.rel (0) target = $region37
    $region36: #{tpu_custom_call.1} parent=1 // pred_region
      %96 = dma.done [#allocation7], 2048
    $region37: #{tpu_custom_call.1} parent=1 // pred_fallthru
      _
    // Predicated region
    $region38: #{tpu_custom_call.1} parent=1 // pred_check
      _
    $region39: #{tpu_custom_call.1} parent=1 // pred_check_branch
      %98 = sbr.rel (0) target = $region41
    $region40: #{tpu_custom_call.1} parent=1 // pred_region
      %100 = dma.done [#allocation10], 4096
    $region41: #{tpu_custom_call.1} parent=1 // pred_fallthru
      _
    // Predicated region
    $region42: #{tpu_custom_call.1} parent=1 // pred_check
      _
    $region43: #{tpu_custom_call.1} parent=1 // pred_check_branch
      %102 = sbr.rel (0) target = $region45
    $region44: #{tpu_custom_call.1} parent=1 // pred_region
      %104 = dma.done [#allocation10], 2048
    $region45: #{tpu_custom_call.1} parent=1 // pred_fallthru
      _
    %p105 = scmp.eq.s32.totalorder 0, 0
    // Predicated region
    $region46: #{tpu_custom_call.1} parent=1 // pred_check
      %p106 = pneg %p105
    $region47: #{tpu_custom_call.1} parent=1 // pred_check_branch
      %108 = sbr.rel (%p106) target = $region49
    $region48: #{tpu_custom_call.1} parent=1 // pred_region
      %109 = vst [vmem:[#allocation2] sm:$0xff] 0.0
      %110 = vst [vmem:[#allocation2 + $0x10] sm:$0xff] 0.0
      %111 = vst [vmem:[#allocation2 + $0x20] sm:$0xff] 0.0
      %112 = vst [vmem:[#allocation2 + $0x30] sm:$0xff] 0.0
      %113 = vst [vmem:[#allocation2 + $0x40] sm:$0xff] 0.0
      %114 = vst [vmem:[#allocation2 + $0x50] sm:$0xff] 0.0
      %115 = vst [vmem:[#allocation2 + $0x60] sm:$0xff] 0.0
      %116 = vst [vmem:[#allocation2 + $0x70] sm:$0xff] 0.0
      %117 = vst [vmem:[#allocation2 + $0x80] sm:$0xff] 0.0
      %118 = vst [vmem:[#allocation2 + $0x90] sm:$0xff] 0.0
      %119 = vst [vmem:[#allocation2 + $0xa0] sm:$0xff] 0.0
      %120 = vst [vmem:[#allocation2 + $0xb0] sm:$0xff] 0.0
      %121 = vst [vmem:[#allocation2 + $0xc0] sm:$0xff] 0.0
      %122 = vst [vmem:[#allocation2 + $0xd0] sm:$0xff] 0.0
      %123 = vst [vmem:[#allocation2 + $0xe0] sm:$0xff] 0.0
      %124 = vst [vmem:[#allocation2 + $0xf0] sm:$0xff] 0.0
      %v125 = vld [vmem:[#allocation8] sm:$0xff]
      %v126 = vld [vmem:[#allocation8 + $0x8] sm:$0xff]
      %v127 = vld [vmem:[#allocation8 + $0x10] sm:$0xff]
      %v128 = vld [vmem:[#allocation8 + $0x18] sm:$0xff]
      %v129 = vld [vmem:[#allocation8 + $0x20] sm:$0xff]
      %v130 = vld [vmem:[#allocation8 + $0x28] sm:$0xff]
      %v131 = vld [vmem:[#allocation8 + $0x30] sm:$0xff]
      %v132 = vld [vmem:[#allocation8 + $0x38] sm:$0xff]
      %v133 = vld [vmem:[#allocation8 + $0x40] sm:$0xff]
      %v134 = vld [vmem:[#allocation8 + $0x48] sm:$0xff]
      %v135 = vld [vmem:[#allocation8 + $0x50] sm:$0xff]
      %v136 = vld [vmem:[#allocation8 + $0x58] sm:$0xff]
      %v137 = vld [vmem:[#allocation8 + $0x60] sm:$0xff]
      %v138 = vld [vmem:[#allocation8 + $0x68] sm:$0xff]
      %v139 = vld [vmem:[#allocation8 + $0x70] sm:$0xff]
      %v140 = vld [vmem:[#allocation8 + $0x78] sm:$0xff]
      %141 = vst [vmem:[#allocation2 + $0x8] sm:$0xff] %v125
      %142 = vst [vmem:[#allocation2 + $0x18] sm:$0xff] %v126
      %143 = vst [vmem:[#allocation2 + $0x28] sm:$0xff] %v127
      %144 = vst [vmem:[#allocation2 + $0x38] sm:$0xff] %v128
      %145 = vst [vmem:[#allocation2 + $0x48] sm:$0xff] %v129
      %146 = vst [vmem:[#allocation2 + $0x58] sm:$0xff] %v130
      %147 = vst [vmem:[#allocation2 + $0x68] sm:$0xff] %v131
      %148 = vst [vmem:[#allocation2 + $0x78] sm:$0xff] %v132
      %149 = vst [vmem:[#allocation2 + $0x88] sm:$0xff] %v133
      %150 = vst [vmem:[#allocation2 + $0x98] sm:$0xff] %v134
      %151 = vst [vmem:[#allocation2 + $0xa8] sm:$0xff] %v135
      %152 = vst [vmem:[#allocation2 + $0xb8] sm:$0xff] %v136
      %153 = vst [vmem:[#allocation2 + $0xc8] sm:$0xff] %v137
      %154 = vst [vmem:[#allocation2 + $0xd8] sm:$0xff] %v138
      %155 = vst [vmem:[#allocation2 + $0xe8] sm:$0xff] %v139
      %156 = vst [vmem:[#allocation2 + $0xf8] sm:$0xff] %v140
    $region49: #{tpu_custom_call.1} parent=1 // pred_fallthru
      _
    %v157 = vld [vmem:[#allocation2] sm:$0xff]
    %v158 = vld [vmem:[#allocation2 + $0x10] sm:$0xff]
    %v159 = vld [vmem:[#allocation2 + $0x20] sm:$0xff]
    %v160 = vld [vmem:[#allocation2 + $0x30] sm:$0xff]
    %v161 = vld [vmem:[#allocation2 + $0x40] sm:$0xff]
    %v162 = vld [vmem:[#allocation2 + $0x50] sm:$0xff]
    %v163 = vld [vmem:[#allocation2 + $0x60] sm:$0xff]
    %v164 = vld [vmem:[#allocation2 + $0x70] sm:$0xff]
    %v165 = vld [vmem:[#allocation2 + $0x80] sm:$0xff]
    %v166 = vld [vmem:[#allocation2 + $0x90] sm:$0xff]
    %v167 = vld [vmem:[#allocation2 + $0xa0] sm:$0xff]
    %v168 = vld [vmem:[#allocation2 + $0xb0] sm:$0xff]
    %v169 = vld [vmem:[#allocation2 + $0xc0] sm:$0xff]
    %v170 = vld [vmem:[#allocation2 + $0xd0] sm:$0xff]
    %v171 = vld [vmem:[#allocation2 + $0xe0] sm:$0xff]
    %v172 = vld [vmem:[#allocation2 + $0xf0] sm:$0xff]
    %v173 = vld [vmem:[#allocation3] sm:$0xf]
    %v174 = vld [vmem:[#allocation3 + $0x4] sm:$0xf]
    %v175 = vld [vmem:[#allocation3 + $0x8] sm:$0xf]
    %v176 = vld [vmem:[#allocation3 + $0xc] sm:$0xf]
    %v177 = vld [vmem:[#allocation3 + $0x10] sm:$0xf]
    %v178 = vld [vmem:[#allocation3 + $0x14] sm:$0xf]
    %v179 = vld [vmem:[#allocation3 + $0x18] sm:$0xf]
    %v180 = vld [vmem:[#allocation3 + $0x1c] sm:$0xf]
    %v181 = vld [vmem:[#allocation3 + $0x20] sm:$0xf]
    %v182 = vld [vmem:[#allocation3 + $0x24] sm:$0xf]
    %v183 = vld [vmem:[#allocation3 + $0x28] sm:$0xf]
    %v184 = vld [vmem:[#allocation3 + $0x2c] sm:$0xf]
    %v185 = vld [vmem:[#allocation3 + $0x30] sm:$0xf]
    %v186 = vld [vmem:[#allocation3 + $0x34] sm:$0xf]
    %v187 = vld [vmem:[#allocation3 + $0x38] sm:$0xf]
    %v188 = vld [vmem:[#allocation3 + $0x3c] sm:$0xf]
    %v189 = vunpack.c.l.bf16 %v173
    %v190 = vunpack.c.l.bf16 %v174
    %v191 = vunpack.c.l.bf16 %v175
    %v192 = vunpack.c.l.bf16 %v176
    %v193 = vunpack.c.l.bf16 %v177
    %v194 = vunpack.c.l.bf16 %v178
    %v195 = vunpack.c.l.bf16 %v179
    %v196 = vunpack.c.l.bf16 %v180
    %v197 = vunpack.c.l.bf16 %v181
    %v198 = vunpack.c.l.bf16 %v182
    %v199 = vunpack.c.l.bf16 %v183
    %v200 = vunpack.c.l.bf16 %v184
    %v201 = vunpack.c.l.bf16 %v185
    %v202 = vunpack.c.l.bf16 %v186
    %v203 = vunpack.c.l.bf16 %v187
    %v204 = vunpack.c.l.bf16 %v188
    %v205 = vld [vmem:[#allocation6] sm:$0xff]
    %v206 = vld [vmem:[#allocation6 + $0x8] sm:$0xff]
    %v207 = vld [vmem:[#allocation6 + $0x10] sm:$0xff]
    %v208 = vld [vmem:[#allocation6 + $0x18] sm:$0xff]
    %v209 = vld [vmem:[#allocation6 + $0x20] sm:$0xff]
    %v210 = vld [vmem:[#allocation6 + $0x28] sm:$0xff]
    %v211 = vld [vmem:[#allocation6 + $0x30] sm:$0xff]
    %v212 = vld [vmem:[#allocation6 + $0x38] sm:$0xff]
    %v213 = vld [vmem:[#allocation6 + $0x40] sm:$0xff]
    %v214 = vld [vmem:[#allocation6 + $0x48] sm:$0xff]
    %v215 = vld [vmem:[#allocation6 + $0x50] sm:$0xff]
    %v216 = vld [vmem:[#allocation6 + $0x58] sm:$0xff]
    %v217 = vld [vmem:[#allocation6 + $0x60] sm:$0xff]
    %v218 = vld [vmem:[#allocation6 + $0x68] sm:$0xff]
    %v219 = vld [vmem:[#allocation6 + $0x70] sm:$0xff]
    %v220 = vld [vmem:[#allocation6 + $0x78] sm:$0xff]
    %221 = vmatpush.msra.mxu0 %v220
    %222 = vmatpush.msra.mxu0 %v219
    %223 = vmatpush.msra.mxu0 %v218
    %224 = vmatpush.msra.mxu0 %v217
    %225 = vmatpush.msra.mxu0 %v216
    %226 = vmatpush.msra.mxu0 %v215
    %227 = vmatpush.msra.mxu0 %v214
    %228 = vmatpush.msra.mxu0 %v213
    %229 = vmatpush.msra.mxu0 %v212
    %230 = vmatpush.msra.mxu0 %v211
    %231 = vmatpush.msra.mxu0 %v210
    %232 = vmatpush.msra.mxu0 %v209
    %233 = vmatpush.msra.mxu0 %v208
    %234 = vmatpush.msra.mxu0 %v207
    %235 = vmatpush.msra.mxu0 %v206
    %236 = vmatpush.msra.mxu0 %v205
    %237 = vmatmul.f32.gmra.mxu0 %v189
    %v238 = vpop.f32.mrf.mxu0
    %v239 = vadd.f32 0.0, %v238
    %240 = vmatmul.f32.gmra.mxu0 %v190
    %v241 = vpop.f32.mrf.mxu0
    %v242 = vadd.f32 0.0, %v241
    %243 = vmatmul.f32.gmra.mxu0 %v191
    %v244 = vpop.f32.mrf.mxu0
    %v245 = vadd.f32 0.0, %v244
    %246 = vmatmul.f32.gmra.mxu0 %v192
    %v247 = vpop.f32.mrf.mxu0
    %v248 = vadd.f32 0.0, %v247
    %249 = vmatmul.f32.gmra.mxu0 %v193
    %v250 = vpop.f32.mrf.mxu0
    %v251 = vadd.f32 0.0, %v250
    %252 = vmatmul.f32.gmra.mxu0 %v194
    %v253 = vpop.f32.mrf.mxu0
    %v254 = vadd.f32 0.0, %v253
    %255 = vmatmul.f32.gmra.mxu0 %v195
    %v256 = vpop.f32.mrf.mxu0
    %v257 = vadd.f32 0.0, %v256
    %258 = vmatmul.f32.gmra.mxu0 %v196
    %v259 = vpop.f32.mrf.mxu0
    %v260 = vadd.f32 0.0, %v259
    %261 = vmatmul.f32.gmra.mxu0 %v197
    %v262 = vpop.f32.mrf.mxu0
    %v263 = vadd.f32 0.0, %v262
    %264 = vmatmul.f32.gmra.mxu0 %v198
    %v265 = vpop.f32.mrf.mxu0
    %v266 = vadd.f32 0.0, %v265
    %267 = vmatmul.f32.gmra.mxu0 %v199
    %v268 = vpop.f32.mrf.mxu0
    %v269 = vadd.f32 0.0, %v268
    %270 = vmatmul.f32.gmra.mxu0 %v200
    %v271 = vpop.f32.mrf.mxu0
    %v272 = vadd.f32 0.0, %v271
    %273 = vmatmul.f32.gmra.mxu0 %v201
    %v274 = vpop.f32.mrf.mxu0
    %v275 = vadd.f32 0.0, %v274
    %276 = vmatmul.f32.gmra.mxu0 %v202
    %v277 = vpop.f32.mrf.mxu0
    %v278 = vadd.f32 0.0, %v277
    %279 = vmatmul.f32.gmra.mxu0 %v203
    %v280 = vpop.f32.mrf.mxu0
    %v281 = vadd.f32 0.0, %v280
    %282 = vmatmul.f32.gmra.mxu0 %v204
    %v283 = vpop.f32.mrf.mxu0
    %v284 = vadd.f32 0.0, %v283
    %285 = vdwg.mxu0
    %v286 = vadd.f32 %v157, %v239
    %v287 = vadd.f32 %v158, %v242
    %v288 = vadd.f32 %v159, %v245
    %v289 = vadd.f32 %v160, %v248
    %v290 = vadd.f32 %v161, %v251
    %v291 = vadd.f32 %v162, %v254
    %v292 = vadd.f32 %v163, %v257
    %v293 = vadd.f32 %v164, %v260
    %v294 = vadd.f32 %v165, %v263
    %v295 = vadd.f32 %v166, %v266
    %v296 = vadd.f32 %v167, %v269
    %v297 = vadd.f32 %v168, %v272
    %v298 = vadd.f32 %v169, %v275
    %v299 = vadd.f32 %v170, %v278
    %v300 = vadd.f32 %v171, %v281
    %v301 = vadd.f32 %v172, %v284
    %302 = vst [vmem:[#allocation2] sm:$0xff] %v286
    %303 = vst [vmem:[#allocation2 + $0x10] sm:$0xff] %v287
    %304 = vst [vmem:[#allocation2 + $0x20] sm:$0xff] %v288
    %305 = vst [vmem:[#allocation2 + $0x30] sm:$0xff] %v289
    %306 = vst [vmem:[#allocation2 + $0x40] sm:$0xff] %v290
    %307 = vst [vmem:[#allocation2 + $0x50] sm:$0xff] %v291
    %308 = vst [vmem:[#allocation2 + $0x60] sm:$0xff] %v292
    %309 = vst [vmem:[#allocation2 + $0x70] sm:$0xff] %v293
    %310 = vst [vmem:[#allocation2 + $0x80] sm:$0xff] %v294
    %311 = vst [vmem:[#allocation2 + $0x90] sm:$0xff] %v295
    %312 = vst [vmem:[#allocation2 + $0xa0] sm:$0xff] %v296
    %313 = vst [vmem:[#allocation2 + $0xb0] sm:$0xff] %v297
    %314 = vst [vmem:[#allocation2 + $0xc0] sm:$0xff] %v298
    %315 = vst [vmem:[#allocation2 + $0xd0] sm:$0xff] %v299
    %316 = vst [vmem:[#allocation2 + $0xe0] sm:$0xff] %v300
    %317 = vst [vmem:[#allocation2 + $0xf0] sm:$0xff] %v301
    // Predicated region
    $region50: #{tpu_custom_call.1} parent=1 // pred_check
      %p318 = pneg %p105
    $region51: #{tpu_custom_call.1} parent=1 // pred_check_branch
      %320 = sbr.rel (%p318) target = $region53
    $region52: #{tpu_custom_call.1} parent=1 // pred_region
      %v321 = vld [vmem:[#allocation2] sm:$0xff]
      %v322 = vld [vmem:[#allocation2 + $0x8] sm:$0xff]
      %v323 = vld [vmem:[#allocation2 + $0x10] sm:$0xff]
      %v324 = vld [vmem:[#allocation2 + $0x18] sm:$0xff]
      %v325 = vld [vmem:[#allocation2 + $0x20] sm:$0xff]
      %v326 = vld [vmem:[#allocation2 + $0x28] sm:$0xff]
      %v327 = vld [vmem:[#allocation2 + $0x30] sm:$0xff]
      %v328 = vld [vmem:[#allocation2 + $0x38] sm:$0xff]
      %v329 = vld [vmem:[#allocation2 + $0x40] sm:$0xff]
      %v330 = vld [vmem:[#allocation2 + $0x48] sm:$0xff]
      %v331 = vld [vmem:[#allocation2 + $0x50] sm:$0xff]
      %v332 = vld [vmem:[#allocation2 + $0x58] sm:$0xff]
      %v333 = vld [vmem:[#allocation2 + $0x60] sm:$0xff]
      %v334 = vld [vmem:[#allocation2 + $0x68] sm:$0xff]
      %v335 = vld [vmem:[#allocation2 + $0x70] sm:$0xff]
      %v336 = vld [vmem:[#allocation2 + $0x78] sm:$0xff]
      %v337 = vld [vmem:[#allocation2 + $0x80] sm:$0xff]
      %v338 = vld [vmem:[#allocation2 + $0x88] sm:$0xff]
      %v339 = vld [vmem:[#allocation2 + $0x90] sm:$0xff]
      %v340 = vld [vmem:[#allocation2 + $0x98] sm:$0xff]
      %v341 = vld [vmem:[#allocation2 + $0xa0] sm:$0xff]
      %v342 = vld [vmem:[#allocation2 + $0xa8] sm:$0xff]
      %v343 = vld [vmem:[#allocation2 + $0xb0] sm:$0xff]
      %v344 = vld [vmem:[#allocation2 + $0xb8] sm:$0xff]
      %v345 = vld [vmem:[#allocation2 + $0xc0] sm:$0xff]
      %v346 = vld [vmem:[#allocation2 + $0xc8] sm:$0xff]
      %v347 = vld [vmem:[#allocation2 + $0xd0] sm:$0xff]
      %v348 = vld [vmem:[#allocation2 + $0xd8] sm:$0xff]
      %v349 = vld [vmem:[#allocation2 + $0xe0] sm:$0xff]
      %v350 = vld [vmem:[#allocation2 + $0xe8] sm:$0xff]
      %v351 = vld [vmem:[#allocation2 + $0xf0] sm:$0xff]
      %v352 = vld [vmem:[#allocation2 + $0xf8] sm:$0xff]
      %v353 = vld [vmem:[#allocation9] sm:$0xff]
      %v354 = vld [vmem:[#allocation9 + $0x8] sm:$0xff]
      %v355 = vld [vmem:[#allocation9 + $0x10] sm:$0xff]
      %v356 = vld [vmem:[#allocation9 + $0x18] sm:$0xff]
      %v357 = vld [vmem:[#allocation9 + $0x20] sm:$0xff]
      %v358 = vld [vmem:[#allocation9 + $0x28] sm:$0xff]
      %v359 = vld [vmem:[#allocation9 + $0x30] sm:$0xff]
      %v360 = vld [vmem:[#allocation9 + $0x38] sm:$0xff]
      %v361 = vld [vmem:[#allocation9 + $0x40] sm:$0xff]
      %v362 = vld [vmem:[#allocation9 + $0x48] sm:$0xff]
      %v363 = vld [vmem:[#allocation9 + $0x50] sm:$0xff]
      %v364 = vld [vmem:[#allocation9 + $0x58] sm:$0xff]
      %v365 = vld [vmem:[#allocation9 + $0x60] sm:$0xff]
      %v366 = vld [vmem:[#allocation9 + $0x68] sm:$0xff]
      %v367 = vld [vmem:[#allocation9 + $0x70] sm:$0xff]
      %v368 = vld [vmem:[#allocation9 + $0x78] sm:$0xff]
      %v369 = vld [vmem:[#allocation9 + $0x80] sm:$0xff]
      %v370 = vld [vmem:[#allocation9 + $0x88] sm:$0xff]
      %v371 = vld [vmem:[#allocation9 + $0x90] sm:$0xff]
      %v372 = vld [vmem:[#allocation9 + $0x98] sm:$0xff]
      %v373 = vld [vmem:[#allocation9 + $0xa0] sm:$0xff]
      %v374 = vld [vmem:[#allocation9 + $0xa8] sm:$0xff]
      %v375 = vld [vmem:[#allocation9 + $0xb0] sm:$0xff]
      %v376 = vld [vmem:[#allocation9 + $0xb8] sm:$0xff]
      %v377 = vld [vmem:[#allocation9 + $0xc0] sm:$0xff]
      %v378 = vld [vmem:[#allocation9 + $0xc8] sm:$0xff]
      %v379 = vld [vmem:[#allocation9 + $0xd0] sm:$0xff]
      %v380 = vld [vmem:[#allocation9 + $0xd8] sm:$0xff]
      %v381 = vld [vmem:[#allocation9 + $0xe0] sm:$0xff]
      %v382 = vld [vmem:[#allocation9 + $0xe8] sm:$0xff]
      %v383 = vld [vmem:[#allocation9 + $0xf0] sm:$0xff]
      %v384 = vld [vmem:[#allocation9 + $0xf8] sm:$0xff]
      %v385 = vld [vmem:[%s4] sm:$0x1]
      %v387 = vperm.slane %v385, 0
      %389 = vmatpush.msra.mxu0 %v368
      %390 = vmatpush.msra.mxu0 %v367
      %391 = vmatpush.msra.mxu0 %v366
      %392 = vmatpush.msra.mxu0 %v365
      %393 = vmatpush.msra.mxu0 %v364
      %394 = vmatpush.msra.mxu0 %v363
      %395 = vmatpush.msra.mxu0 %v362
      %396 = vmatpush.msra.mxu0 %v361
      %397 = vmatpush.msra.mxu0 %v360
      %398 = vmatpush.msra.mxu0 %v359
      %399 = vmatpush.msra.mxu0 %v358
      %400 = vmatpush.msra.mxu0 %v357
      %401 = vmatpush.msra.mxu0 %v356
      %402 = vmatpush.msra.mxu0 %v355
      %403 = vmatpush.msra.mxu0 %v354
      %404 = vmatpush.msra.mxu0 %v353
      %405 = vmatmul.f32.gmra.mxu0 %v321
      %v406 = vpop.f32.mrf.mxu0
      %v407 = vadd.f32 %v387, %v406
      %408 = vmatmul.f32.gmra.mxu0 %v323
      %v409 = vpop.f32.mrf.mxu0
      %v410 = vadd.f32 %v387, %v409
      %411 = vmatmul.f32.gmra.mxu0 %v325
      %v412 = vpop.f32.mrf.mxu0
      %v413 = vadd.f32 %v387, %v412
      %414 = vmatmul.f32.gmra.mxu0 %v327
      %v415 = vpop.f32.mrf.mxu0
      %v416 = vadd.f32 %v387, %v415
      %417 = vmatmul.f32.gmra.mxu0 %v329
      %v418 = vpop.f32.mrf.mxu0
      %v419 = vadd.f32 %v387, %v418
      %420 = vmatmul.f32.gmra.mxu0 %v331
      %v421 = vpop.f32.mrf.mxu0
      %v422 = vadd.f32 %v387, %v421
      %423 = vmatmul.f32.gmra.mxu0 %v333
      %v424 = vpop.f32.mrf.mxu0
      %v425 = vadd.f32 %v387, %v424
      %426 = vmatmul.f32.gmra.mxu0 %v335
      %v427 = vpop.f32.mrf.mxu0
      %v428 = vadd.f32 %v387, %v427
      %429 = vmatmul.f32.gmra.mxu0 %v337
      %v430 = vpop.f32.mrf.mxu0
      %v431 = vadd.f32 %v387, %v430
      %432 = vmatmul.f32.gmra.mxu0 %v339
      %v433 = vpop.f32.mrf.mxu0
      %v434 = vadd.f32 %v387, %v433
      %435 = vmatmul.f32.gmra.mxu0 %v341
      %v436 = vpop.f32.mrf.mxu0
      %v437 = vadd.f32 %v387, %v436
      %438 = vmatmul.f32.gmra.mxu0 %v343
      %v439 = vpop.f32.mrf.mxu0
      %v440 = vadd.f32 %v387, %v439
      %441 = vmatmul.f32.gmra.mxu0 %v345
      %v442 = vpop.f32.mrf.mxu0
      %v443 = vadd.f32 %v387, %v442
      %444 = vmatmul.f32.gmra.mxu0 %v347
      %v445 = vpop.f32.mrf.mxu0
      %v446 = vadd.f32 %v387, %v445
      %447 = vmatmul.f32.gmra.mxu0 %v349
      %v448 = vpop.f32.mrf.mxu0
      %v449 = vadd.f32 %v387, %v448
      %450 = vmatmul.f32.gmra.mxu0 %v351
      %v451 = vpop.f32.mrf.mxu0
      %v452 = vadd.f32 %v387, %v451
      %453 = vdwg.mxu0
      %454 = vmatpush.msra.mxu0 %v384
      %455 = vmatpush.msra.mxu0 %v383
      %456 = vmatpush.msra.mxu0 %v382
      %457 = vmatpush.msra.mxu0 %v381
      %458 = vmatpush.msra.mxu0 %v380
      %459 = vmatpush.msra.mxu0 %v379
      %460 = vmatpush.msra.mxu0 %v378
      %461 = vmatpush.msra.mxu0 %v377
      %462 = vmatpush.msra.mxu0 %v376
      %463 = vmatpush.msra.mxu0 %v375
      %464 = vmatpush.msra.mxu0 %v374
      %465 = vmatpush.msra.mxu0 %v373
      %466 = vmatpush.msra.mxu0 %v372
      %467 = vmatpush.msra.mxu0 %v371
      %468 = vmatpush.msra.mxu0 %v370
      %469 = vmatpush.msra.mxu0 %v369
      %470 = vmatmul.f32.gmra.mxu0 %v322
      %v471 = vpop.f32.mrf.mxu0
      %v472 = vadd.f32 %v407, %v471
      %473 = vmatmul.f32.gmra.mxu0 %v324
      %v474 = vpop.f32.mrf.mxu0
      %v475 = vadd.f32 %v410, %v474
      %476 = vmatmul.f32.gmra.mxu0 %v326
      %v477 = vpop.f32.mrf.mxu0
      %v478 = vadd.f32 %v413, %v477
      %479 = vmatmul.f32.gmra.mxu0 %v328
      %v480 = vpop.f32.mrf.mxu0
      %v481 = vadd.f32 %v416, %v480
      %482 = vmatmul.f32.gmra.mxu0 %v330
      %v483 = vpop.f32.mrf.mxu0
      %v484 = vadd.f32 %v419, %v483
      %485 = vmatmul.f32.gmra.mxu0 %v332
      %v486 = vpop.f32.mrf.mxu0
      %v487 = vadd.f32 %v422, %v486
      %488 = vmatmul.f32.gmra.mxu0 %v334
      %v489 = vpop.f32.mrf.mxu0
      %v490 = vadd.f32 %v425, %v489
      %491 = vmatmul.f32.gmra.mxu0 %v336
      %v492 = vpop.f32.mrf.mxu0
      %v493 = vadd.f32 %v428, %v492
      %494 = vmatmul.f32.gmra.mxu0 %v338
      %v495 = vpop.f32.mrf.mxu0
      %v496 = vadd.f32 %v431, %v495
      %497 = vmatmul.f32.gmra.mxu0 %v340
      %v498 = vpop.f32.mrf.mxu0
      %v499 = vadd.f32 %v434, %v498
      %500 = vmatmul.f32.gmra.mxu0 %v342
      %v501 = vpop.f32.mrf.mxu0
      %v502 = vadd.f32 %v437, %v501
      %503 = vmatmul.f32.gmra.mxu0 %v344
      %v504 = vpop.f32.mrf.mxu0
      %v505 = vadd.f32 %v440, %v504
      %506 = vmatmul.f32.gmra.mxu0 %v346
      %v507 = vpop.f32.mrf.mxu0
      %v508 = vadd.f32 %v443, %v507
      %509 = vmatmul.f32.gmra.mxu0 %v348
      %v510 = vpop.f32.mrf.mxu0
      %v511 = vadd.f32 %v446, %v510
      %512 = vmatmul.f32.gmra.mxu0 %v350
      %v513 = vpop.f32.mrf.mxu0
      %v514 = vadd.f32 %v449, %v513
      %515 = vmatmul.f32.gmra.mxu0 %v352
      %v516 = vpop.f32.mrf.mxu0
      %v517 = vadd.f32 %v452, %v516
      %518 = vdwg.mxu0
      %v519 = vmul.f32 %v472, %v472
      %v520 = vmul.f32 %v475, %v475
      %v521 = vmul.f32 %v478, %v478
      %v522 = vmul.f32 %v481, %v481
      %v523 = vmul.f32 %v484, %v484
      %v524 = vmul.f32 %v487, %v487
      %v525 = vmul.f32 %v490, %v490
      %v526 = vmul.f32 %v493, %v493
      %v527 = vmul.f32 %v496, %v496
      %v528 = vmul.f32 %v499, %v499
      %v529 = vmul.f32 %v502, %v502
      %v530 = vmul.f32 %v505, %v505
      %v531 = vmul.f32 %v508, %v508
      %v532 = vmul.f32 %v511, %v511
      %v533 = vmul.f32 %v514, %v514
      %v534 = vmul.f32 %v517, %v517
      %535 = vadd.xlane.f32.xlu0 %v519
      %v536 = vpop.xlane.xlu0 %535
      %537 = vadd.xlane.f32.xlu0 %v520
      %v538 = vpop.xlane.xlu0 %537
      %539 = vadd.xlane.f32.xlu0 %v521
      %v540 = vpop.xlane.xlu0 %539
      %541 = vadd.xlane.f32.xlu0 %v522
      %v542 = vpop.xlane.xlu0 %541
      %543 = vadd.xlane.f32.xlu0 %v523
      %v544 = vpop.xlane.xlu0 %543
      %545 = vadd.xlane.f32.xlu0 %v524
      %v546 = vpop.xlane.xlu0 %545
      %547 = vadd.xlane.f32.xlu0 %v525
      %v548 = vpop.xlane.xlu0 %547
      %549 = vadd.xlane.f32.xlu0 %v526
      %v550 = vpop.xlane.xlu0 %549
      %551 = vadd.xlane.f32.xlu0 %v527
      %v552 = vpop.xlane.xlu0 %551
      %553 = vadd.xlane.f32.xlu0 %v528
      %v554 = vpop.xlane.xlu0 %553
      %555 = vadd.xlane.f32.xlu0 %v529
      %v556 = vpop.xlane.xlu0 %555
      %557 = vadd.xlane.f32.xlu0 %v530
      %v558 = vpop.xlane.xlu0 %557
      %559 = vadd.xlane.f32.xlu0 %v531
      %v560 = vpop.xlane.xlu0 %559
      %561 = vadd.xlane.f32.xlu0 %v532
      %v562 = vpop.xlane.xlu0 %561
      %563 = vadd.xlane.f32.xlu0 %v533
      %v564 = vpop.xlane.xlu0 %563
      %565 = vadd.xlane.f32.xlu0 %v534
      %v566 = vpop.xlane.xlu0 %565
      %v567 = vmax.f32 %v536, 1e-24
      %v568 = vmax.f32 %v538, 1e-24
      %v569 = vmax.f32 %v540, 1e-24
      %v570 = vmax.f32 %v542, 1e-24
      %v571 = vmax.f32 %v544, 1e-24
      %v572 = vmax.f32 %v546, 1e-24
      %v573 = vmax.f32 %v548, 1e-24
      %v574 = vmax.f32 %v550, 1e-24
      %v575 = vmax.f32 %v552, 1e-24
      %v576 = vmax.f32 %v554, 1e-24
      %v577 = vmax.f32 %v556, 1e-24
      %v578 = vmax.f32 %v558, 1e-24
      %v579 = vmax.f32 %v560, 1e-24
      %v580 = vmax.f32 %v562, 1e-24
      %v581 = vmax.f32 %v564, 1e-24
      %v582 = vmax.f32 %v566, 1e-24
      %v583 = vrsqrt.pop %v567
      %v584 = vmul.f32 %v583, %v567
      %v585 = vmul.f32 %v584, %v583
      %v586 = vmul.f32 0.5, %v585
      %v587 = vsub.f32 1.5, %v586
      %v588 = vmul.f32 %v583, %v587
      %vm589 = vweird.f32 %v567
      %vm590 = vweird.f32 %v583
      %vm591 = vmor %vm589, %vm590
      %v592 = vsel %vm591, %v583, %v588
      %v593 = vrsqrt.pop %v568
      %v594 = vmul.f32 %v593, %v568
      %v595 = vmul.f32 %v594, %v593
      %v596 = vmul.f32 0.5, %v595
      %v597 = vsub.f32 1.5, %v596
      %v598 = vmul.f32 %v593, %v597
      %vm599 = vweird.f32 %v568
      %vm600 = vweird.f32 %v593
      %vm601 = vmor %vm599, %vm600
      %v602 = vsel %vm601, %v593, %v598
      %v603 = vrsqrt.pop %v569
      %v604 = vmul.f32 %v603, %v569
      %v605 = vmul.f32 %v604, %v603
      %v606 = vmul.f32 0.5, %v605
      %v607 = vsub.f32 1.5, %v606
      %v608 = vmul.f32 %v603, %v607
      %vm609 = vweird.f32 %v569
      %vm610 = vweird.f32 %v603
      %vm611 = vmor %vm609, %vm610
      %v612 = vsel %vm611, %v603, %v608
      %v613 = vrsqrt.pop %v570
      %v614 = vmul.f32 %v613, %v570
      %v615 = vmul.f32 %v614, %v613
      %v616 = vmul.f32 0.5, %v615
      %v617 = vsub.f32 1.5, %v616
      %v618 = vmul.f32 %v613, %v617
      %vm619 = vweird.f32 %v570
      %vm620 = vweird.f32 %v613
      %vm621 = vmor %vm619, %vm620
      %v622 = vsel %vm621, %v613, %v618
      %v623 = vrsqrt.pop %v571
      %v624 = vmul.f32 %v623, %v571
      %v625 = vmul.f32 %v624, %v623
      %v626 = vmul.f32 0.5, %v625
      %v627 = vsub.f32 1.5, %v626
      %v628 = vmul.f32 %v623, %v627
      %vm629 = vweird.f32 %v571
      %vm630 = vweird.f32 %v623
      %vm631 = vmor %vm629, %vm630
      %v632 = vsel %vm631, %v623, %v628
      %v633 = vrsqrt.pop %v572
      %v634 = vmul.f32 %v633, %v572
      %v635 = vmul.f32 %v634, %v633
      %v636 = vmul.f32 0.5, %v635
      %v637 = vsub.f32 1.5, %v636
      %v638 = vmul.f32 %v633, %v637
      %vm639 = vweird.f32 %v572
      %vm640 = vweird.f32 %v633
      %vm641 = vmor %vm639, %vm640
      %v642 = vsel %vm641, %v633, %v638
      %v643 = vrsqrt.pop %v573
      %v644 = vmul.f32 %v643, %v573
      %v645 = vmul.f32 %v644, %v643
      %v646 = vmul.f32 0.5, %v645
      %v647 = vsub.f32 1.5, %v646
      %v648 = vmul.f32 %v643, %v647
      %vm649 = vweird.f32 %v573
      %vm650 = vweird.f32 %v643
      %vm651 = vmor %vm649, %vm650
      %v652 = vsel %vm651, %v643, %v648
      %v653 = vrsqrt.pop %v574
      %v654 = vmul.f32 %v653, %v574
      %v655 = vmul.f32 %v654, %v653
      %v656 = vmul.f32 0.5, %v655
      %v657 = vsub.f32 1.5, %v656
      %v658 = vmul.f32 %v653, %v657
      %vm659 = vweird.f32 %v574
      %vm660 = vweird.f32 %v653
      %vm661 = vmor %vm659, %vm660
      %v662 = vsel %vm661, %v653, %v658
      %v663 = vrsqrt.pop %v575
      %v664 = vmul.f32 %v663, %v575
      %v665 = vmul.f32 %v664, %v663
      %v666 = vmul.f32 0.5, %v665
      %v667 = vsub.f32 1.5, %v666
      %v668 = vmul.f32 %v663, %v667
      %vm669 = vweird.f32 %v575
      %vm670 = vweird.f32 %v663
      %vm671 = vmor %vm669, %vm670
      %v672 = vsel %vm671, %v663, %v668
      %v673 = vrsqrt.pop %v576
      %v674 = vmul.f32 %v673, %v576
      %v675 = vmul.f32 %v674, %v673
      %v676 = vmul.f32 0.5, %v675
      %v677 = vsub.f32 1.5, %v676
      %v678 = vmul.f32 %v673, %v677
      %vm679 = vweird.f32 %v576
      %vm680 = vweird.f32 %v673
      %vm681 = vmor %vm679, %vm680
      %v682 = vsel %vm681, %v673, %v678
      %v683 = vrsqrt.pop %v577
      %v684 = vmul.f32 %v683, %v577
      %v685 = vmul.f32 %v684, %v683
      %v686 = vmul.f32 0.5, %v685
      %v687 = vsub.f32 1.5, %v686
      %v688 = vmul.f32 %v683, %v687
      %vm689 = vweird.f32 %v577
      %vm690 = vweird.f32 %v683
      %vm691 = vmor %vm689, %vm690
      %v692 = vsel %vm691, %v683, %v688
      %v693 = vrsqrt.pop %v578
      %v694 = vmul.f32 %v693, %v578
      %v695 = vmul.f32 %v694, %v693
      %v696 = vmul.f32 0.5, %v695
      %v697 = vsub.f32 1.5, %v696
      %v698 = vmul.f32 %v693, %v697
      %vm699 = vweird.f32 %v578
      %vm700 = vweird.f32 %v693
      %vm701 = vmor %vm699, %vm700
      %v702 = vsel %vm701, %v693, %v698
      %v703 = vrsqrt.pop %v579
      %v704 = vmul.f32 %v703, %v579
      %v705 = vmul.f32 %v704, %v703
      %v706 = vmul.f32 0.5, %v705
      %v707 = vsub.f32 1.5, %v706
      %v708 = vmul.f32 %v703, %v707
      %vm709 = vweird.f32 %v579
      %vm710 = vweird.f32 %v703
      %vm711 = vmor %vm709, %vm710
      %v712 = vsel %vm711, %v703, %v708
      %v713 = vrsqrt.pop %v580
      %v714 = vmul.f32 %v713, %v580
      %v715 = vmul.f32 %v714, %v713
      %v716 = vmul.f32 0.5, %v715
      %v717 = vsub.f32 1.5, %v716
      %v718 = vmul.f32 %v713, %v717
      %vm719 = vweird.f32 %v580
      %vm720 = vweird.f32 %v713
      %vm721 = vmor %vm719, %vm720
      %v722 = vsel %vm721, %v713, %v718
      %v723 = vrsqrt.pop %v581
      %v724 = vmul.f32 %v723, %v581
      %v725 = vmul.f32 %v724, %v723
      %v726 = vmul.f32 0.5, %v725
      %v727 = vsub.f32 1.5, %v726
      %v728 = vmul.f32 %v723, %v727
      %vm729 = vweird.f32 %v581
      %vm730 = vweird.f32 %v723
      %vm731 = vmor %vm729, %vm730
      %v732 = vsel %vm731, %v723, %v728
      %v733 = vrsqrt.pop %v582
      %v734 = vmul.f32 %v733, %v582
      %v735 = vmul.f32 %v734, %v733
      %v736 = vmul.f32 0.5, %v735
      %v737 = vsub.f32 1.5, %v736
      %v738 = vmul.f32 %v733, %v737
      %vm739 = vweird.f32 %v582
      %vm740 = vweird.f32 %v733
      %vm741 = vmor %vm739, %vm740
      %v742 = vsel %vm741, %v733, %v738
      %v743 = vmul.f32 %v472, %v592
      %v744 = vmul.f32 %v475, %v602
      %v745 = vmul.f32 %v478, %v612
      %v746 = vmul.f32 %v481, %v622
      %v747 = vmul.f32 %v484, %v632
      %v748 = vmul.f32 %v487, %v642
      %v749 = vmul.f32 %v490, %v652
      %v750 = vmul.f32 %v493, %v662
      %v751 = vmul.f32 %v496, %v672
      %v752 = vmul.f32 %v499, %v682
      %v753 = vmul.f32 %v502, %v692
      %v754 = vmul.f32 %v505, %v702
      %v755 = vmul.f32 %v508, %v712
      %v756 = vmul.f32 %v511, %v722
      %v757 = vmul.f32 %v514, %v732
      %v758 = vmul.f32 %v517, %v742
      %v759 = vmax.f32 %v743, 0.0
      %v760 = vmax.f32 %v744, 0.0
      %v761 = vmax.f32 %v745, 0.0
      %v762 = vmax.f32 %v746, 0.0
      %v763 = vmax.f32 %v747, 0.0
      %v764 = vmax.f32 %v748, 0.0
      %v765 = vmax.f32 %v749, 0.0
      %v766 = vmax.f32 %v750, 0.0
      %v767 = vmax.f32 %v751, 0.0
      %v768 = vmax.f32 %v752, 0.0
      %v769 = vmax.f32 %v753, 0.0
      %v770 = vmax.f32 %v754, 0.0
      %v771 = vmax.f32 %v755, 0.0
      %v772 = vmax.f32 %v756, 0.0
      %v773 = vmax.f32 %v757, 0.0
      %v774 = vmax.f32 %v758, 0.0
      %775 = vst [vmem:[#allocation12] sm:$0xff] %v759
      %776 = vst [vmem:[#allocation12 + $0x8] sm:$0xff] %v760
      %777 = vst [vmem:[#allocation12 + $0x10] sm:$0xff] %v761
      %778 = vst [vmem:[#allocation12 + $0x18] sm:$0xff] %v762
      %779 = vst [vmem:[#allocation12 + $0x20] sm:$0xff] %v763
      %780 = vst [vmem:[#allocation12 + $0x28] sm:$0xff] %v764
      %781 = vst [vmem:[#allocation12 + $0x30] sm:$0xff] %v765
      %782 = vst [vmem:[#allocation12 + $0x38] sm:$0xff] %v766
      %783 = vst [vmem:[#allocation12 + $0x40] sm:$0xff] %v767
      %784 = vst [vmem:[#allocation12 + $0x48] sm:$0xff] %v768
      %785 = vst [vmem:[#allocation12 + $0x50] sm:$0xff] %v769
      %786 = vst [vmem:[#allocation12 + $0x58] sm:$0xff] %v770
      %787 = vst [vmem:[#allocation12 + $0x60] sm:$0xff] %v771
      %788 = vst [vmem:[#allocation12 + $0x68] sm:$0xff] %v772
      %789 = vst [vmem:[#allocation12 + $0x70] sm:$0xff] %v773
      %790 = vst [vmem:[#allocation12 + $0x78] sm:$0xff] %v774
      %v791 = vld [vmem:[#allocation11] sm:$0xff]
      %v792 = vld [vmem:[#allocation11 + $0x8] sm:$0xff]
      %v793 = vld [vmem:[#allocation11 + $0x10] sm:$0xff]
      %v794 = vld [vmem:[#allocation11 + $0x18] sm:$0xff]
      %v795 = vld [vmem:[#allocation11 + $0x20] sm:$0xff]
      %v796 = vld [vmem:[#allocation11 + $0x28] sm:$0xff]
      %v797 = vld [vmem:[#allocation11 + $0x30] sm:$0xff]
      %v798 = vld [vmem:[#allocation11 + $0x38] sm:$0xff]
      %v799 = vld [vmem:[#allocation11 + $0x40] sm:$0xff]
      %v800 = vld [vmem:[#allocation11 + $0x48] sm:$0xff]
      %v801 = vld [vmem:[#allocation11 + $0x50] sm:$0xff]
      %v802 = vld [vmem:[#allocation11 + $0x58] sm:$0xff]
      %v803 = vld [vmem:[#allocation11 + $0x60] sm:$0xff]
      %v804 = vld [vmem:[#allocation11 + $0x68] sm:$0xff]
      %v805 = vld [vmem:[#allocation11 + $0x70] sm:$0xff]
      %v806 = vld [vmem:[#allocation11 + $0x78] sm:$0xff]
      %807 = vmatpush.msra.mxu0 %v806
      %808 = vmatpush.msra.mxu0 %v805
      %809 = vmatpush.msra.mxu0 %v804
      %810 = vmatpush.msra.mxu0 %v803
      %811 = vmatpush.msra.mxu0 %v802
      %812 = vmatpush.msra.mxu0 %v801
      %813 = vmatpush.msra.mxu0 %v800
      %814 = vmatpush.msra.mxu0 %v799
      %815 = vmatpush.msra.mxu0 %v798
      %816 = vmatpush.msra.mxu0 %v797
      %817 = vmatpush.msra.mxu0 %v796
      %818 = vmatpush.msra.mxu0 %v795
      %819 = vmatpush.msra.mxu0 %v794
      %820 = vmatpush.msra.mxu0 %v793
      %821 = vmatpush.msra.mxu0 %v792
      %822 = vmatpush.msra.mxu0 %v791
      %823 = vmatmul.f32.gmra.mxu0 %v759
      %v824 = vpop.f32.mrf.mxu0
      %v825 = vadd.f32 0.0, %v824
      %826 = vmatmul.f32.gmra.mxu0 %v760
      %v827 = vpop.f32.mrf.mxu0
      %v828 = vadd.f32 0.0, %v827
      %829 = vmatmul.f32.gmra.mxu0 %v761
      %v830 = vpop.f32.mrf.mxu0
      %v831 = vadd.f32 0.0, %v830
      %832 = vmatmul.f32.gmra.mxu0 %v762
      %v833 = vpop.f32.mrf.mxu0
      %v834 = vadd.f32 0.0, %v833
      %835 = vmatmul.f32.gmra.mxu0 %v763
      %v836 = vpop.f32.mrf.mxu0
      %v837 = vadd.f32 0.0, %v836
      %838 = vmatmul.f32.gmra.mxu0 %v764
      %v839 = vpop.f32.mrf.mxu0
      %v840 = vadd.f32 0.0, %v839
      %841 = vmatmul.f32.gmra.mxu0 %v765
      %v842 = vpop.f32.mrf.mxu0
      %v843 = vadd.f32 0.0, %v842
      %844 = vmatmul.f32.gmra.mxu0 %v766
      %v845 = vpop.f32.mrf.mxu0
      %v846 = vadd.f32 0.0, %v845
      %847 = vmatmul.f32.gmra.mxu0 %v767
      %v848 = vpop.f32.mrf.mxu0
      %v849 = vadd.f32 0.0, %v848
      %850 = vmatmul.f32.gmra.mxu0 %v768
      %v851 = vpop.f32.mrf.mxu0
      %v852 = vadd.f32 0.0, %v851
      %853 = vmatmul.f32.gmra.mxu0 %v769
      %v854 = vpop.f32.mrf.mxu0
      %v855 = vadd.f32 0.0, %v854
      %856 = vmatmul.f32.gmra.mxu0 %v770
      %v857 = vpop.f32.mrf.mxu0
      %v858 = vadd.f32 0.0, %v857
      %859 = vmatmul.f32.gmra.mxu0 %v771
      %v860 = vpop.f32.mrf.mxu0
      %v861 = vadd.f32 0.0, %v860
      %862 = vmatmul.f32.gmra.mxu0 %v772
      %v863 = vpop.f32.mrf.mxu0
      %v864 = vadd.f32 0.0, %v863
      %865 = vmatmul.f32.gmra.mxu0 %v773
      %v866 = vpop.f32.mrf.mxu0
      %v867 = vadd.f32 0.0, %v866
      %868 = vmatmul.f32.gmra.mxu0 %v774
      %v869 = vpop.f32.mrf.mxu0
      %v870 = vadd.f32 0.0, %v869
      %871 = vdwg.mxu0
      %872 = vst [vmem:[#allocation13] sm:$0xff] %v825
      %873 = vst [vmem:[#allocation13 + $0x8] sm:$0xff] %v828
      %874 = vst [vmem:[#allocation13 + $0x10] sm:$0xff] %v831
      %875 = vst [vmem:[#allocation13 + $0x18] sm:$0xff] %v834
      %876 = vst [vmem:[#allocation13 + $0x20] sm:$0xff] %v837
      %877 = vst [vmem:[#allocation13 + $0x28] sm:$0xff] %v840
      %878 = vst [vmem:[#allocation13 + $0x30] sm:$0xff] %v843
      %879 = vst [vmem:[#allocation13 + $0x38] sm:$0xff] %v846
      %880 = vst [vmem:[#allocation13 + $0x40] sm:$0xff] %v849
      %881 = vst [vmem:[#allocation13 + $0x48] sm:$0xff] %v852
      %882 = vst [vmem:[#allocation13 + $0x50] sm:$0xff] %v855
      %883 = vst [vmem:[#allocation13 + $0x58] sm:$0xff] %v858
      %884 = vst [vmem:[#allocation13 + $0x60] sm:$0xff] %v861
      %885 = vst [vmem:[#allocation13 + $0x68] sm:$0xff] %v864
      %886 = vst [vmem:[#allocation13 + $0x70] sm:$0xff] %v867
      %887 = vst [vmem:[#allocation13 + $0x78] sm:$0xff] %v870
    $region53: #{tpu_custom_call.1} parent=1 // pred_fallthru
      _
    // Predicated region
    $region54: #{tpu_custom_call.1} parent=1 // pred_check
      _
    $region55: #{tpu_custom_call.1} parent=1 // pred_check_branch
      %889 = sbr.rel (0) target = $region57
    $region56: #{tpu_custom_call.1} parent=1 // pred_region
      %891 = vsyncadd [#allocation5], 0
      %s892 = sshll.u32 [#allocation12], 4
      %s893 = int_to_ptr.vmem [resolvable:$true] %s892
      %s894 = sshll.u32 %s6, 4
      %s895 = int_to_ptr.hbm [resolvable:$true] %s894
      %900 = dma.vmem_to_hbm [thread:$0]  %s893, 2048, %s895, [#allocation5], 128, 128, 8
    $region57: #{tpu_custom_call.1} parent=1 // pred_fallthru
      _
    // Predicated region
    $region58: #{tpu_custom_call.1} parent=1 // pred_check
      _
    $region59: #{tpu_custom_call.1} parent=1 // pred_check_branch
      %902 = sbr.rel (0) target = $region61
    $region60: #{tpu_custom_call.1} parent=1 // pred_region
      %904 = vsyncadd [#allocation14], 0
      %s905 = sshll.u32 [#allocation13], 4
      %s906 = int_to_ptr.vmem [resolvable:$true] %s905
      %s907 = sshll.u32 %s7, 4
      %s908 = int_to_ptr.hbm [resolvable:$true] %s907
      %913 = dma.vmem_to_hbm [thread:$0]  %s906, 2048, %s908, [#allocation14], 128, 128, 8
    $region61: #{tpu_custom_call.1} parent=1 // pred_fallthru
      _
    // Predicated region
    $region62: #{tpu_custom_call.1} parent=1 // pred_check
      _
    $region63: #{tpu_custom_call.1} parent=1 // pred_check_branch
      %915 = sbr.rel (0) target = $region65
    $region64: #{tpu_custom_call.1} parent=1 // pred_region
      %917 = dma.done [#allocation5], 2048
    $region65: #{tpu_custom_call.1} parent=1 // pred_fallthru
      _
    // Predicated region
    $region66: #{tpu_custom_call.1} parent=1 // pred_check
      _
    $region67: #{tpu_custom_call.1} parent=1 // pred_check_branch
      %919 = sbr.rel (0) target = $region69
    $region68: #{tpu_custom_call.1} parent=1 // pred_region
      %921 = dma.done [#allocation14], 2048
    $region69: #{tpu_custom_call.1} parent=1 // pred_fallthru
      _
    %922 = vsyncpa [#allocation4], 1
    %923 = vsyncpa [#allocation7], 1
    %924 = vsyncpa [#allocation10], 1
    %925 = vsyncpa [#allocation5], 1
    %926 = vsyncpa [#allocation14], 1

</llo_original>
